<compile_context>
chip_gen: v7x
topology: tpu7x:2x2x1
jax: 0.10.0
libtpu: 0.0.40
codegen_flags: <defaults>
</compile_context>

<pallas_src>
import numpy as np
import jax
import jax.numpy as jnp
from jax.experimental import pallas as pl
from jax.experimental.pallas import tpu as pltpu


def conv_expand_kernel(x_ref, w_ref, b_ref, o_ref):
    # x_ref : (1, TH*W, C)        input rows (original dtype), flattened over (h, w)
    # w_ref : (C, 2*C2)           BN-folded, width-duplicated 1x1 conv weight
    # b_ref : (1, 2*C2)           BN-folded, width-duplicated conv bias (f32)
    # o_ref : (1, TH, 2, W, 2*C2) output tile; memory-identical to (1, 2*TH, 2*W, C2)
    rows, c = x_ref.shape[1], x_ref.shape[2]
    _, th, _, w, c2x2 = o_ref.shape

    # 1x1 conv == per-pixel matmul over channels (MXU, f32 accumulation).  The
    # width duplication of the nearest upsample is already folded into w_ref/b_ref
    # (columns [0:C2] == columns [C2:2*C2]), so the matmul emits the final lane
    # layout directly -- no in-kernel lane concat.
    x = x_ref[...].reshape(rows, c)                      # drop leading 1: free
    acc = jnp.dot(x, w_ref[...], preferred_element_type=jnp.float32)
    r = (acc + b_ref[...]).astype(o_ref.dtype).reshape(th, w, c2x2)

    # H duplication of the nearest upsample: store the same registers twice.
    o_ref[:, :, 0, :, :] = r[None]
    o_ref[:, :, 1, :, :] = r[None]


def _vmem_capacity_bytes():
    """Physical VMEM per TensorCore; conservative fallback if the query fails."""
    try:
        return int(pltpu.get_tpu_info().vmem_capacity_bytes)
    except Exception:
        return 64 << 20  # v7x per-core size (most restrictive)


def _tile_bytes(th, W, C, C2, in_b, out_b):
    """Per-grid-step VMEM: double-buffered in/out blocks + in-kernel temporaries."""
    rows = th * W
    io = 2 * rows * (C * in_b + 4 * C2 * out_b)      # 2x (input block + output block)
    tmp = rows * 2 * C2 * (4 + out_b)                # f32 accumulator + cast result
    return io + tmp


def _auto_tile_h(B, H, W, C, C2, in_b, out_b, budget_bytes, min_steps):
    """Largest divisor of H whose working set fits the budget, preferring an even
    total step count (so both v7x TensorCores stay busy) and a sublane-aligned
    input block (TH*W multiple of 8, or the full image)."""
    cands = []
    for th in range(1, H + 1):
        if H % th:
            continue
        if (th * W) % 8 != 0 and th != H:
            continue
        if (H // th) < min_steps:
            continue
        if _tile_bytes(th, W, C, C2, in_b, out_b) > budget_bytes:
            continue
        cands.append(th)
    if not cands:
        # Nothing fits the (soft) budget: smallest aligned tile.
        for th in range(1, H + 1):
            if H % th == 0 and ((th * W) % 8 == 0 or th == H):
                return th
        return H
    even = [th for th in cands if (B * (H // th)) % 2 == 0]
    return max(even) if even else max(cands)


def conv_expand(x, H, W, gamma, beta, conv_w, conv_b, *, eps=1e-5,
                tile_h=None, vmem_limit_bytes=None):
    """x: (B, L, C) with L == H*W. Returns (B, 4*H*W, C//2) in x.dtype.

    conv_w is the 1x1 conv weight stored as (C, C2) (PyTorch weight (C2, C, 1, 1)
    transposed), conv_b is (C2,).  BatchNorm2d is applied with training-mode batch
    statistics (biased variance), exactly as the PyTorch module in training mode.
    """
    B, L, C = x.shape
    assert L == H * W, "input feature has wrong size"
    assert H % 2 == 0 and W % 2 == 0, f"x size ({H}*{W}) are not even."
    assert conv_w.shape[0] == C
    C2 = conv_w.shape[1]
    out_dtype = x.dtype

    # --- BatchNorm2d batch statistics in ONE pass over x (f32 accumulation). ---
    # Under jit, XLA fuses the cast + both reductions into a single HBM read of x.
    xf = x.astype(jnp.float32)
    n = B * L
    s1 = jnp.sum(xf, axis=(0, 1))
    s2 = jnp.sum(xf * xf, axis=(0, 1))
    mean = s1 / n
    var = jnp.maximum(s2 / n - mean * mean, 0.0)   # biased var (PyTorch BN), clamp cancellation
    inv = gamma.astype(jnp.float32) / jnp.sqrt(var + eps)
    shift = beta.astype(jnp.float32) - mean * inv
    # TODO(synk): eval-mode BN would simply substitute running_mean/var for (mean, var).

    # --- Fold BN affine into the 1x1 conv (exact: the conv is linear), then fold
    # the width duplication of the nearest upsample into the weight/bias too. ---
    wf = conv_w.astype(jnp.float32)
    w_fold = inv[:, None] * wf                                     # (C, C2)
    b_fold = shift @ wf + conv_b.astype(jnp.float32)               # (C2,)
    w2 = jnp.concatenate([w_fold, w_fold], axis=1).astype(x.dtype)      # (C, 2*C2)
    b2 = jnp.concatenate([b_fold, b_fold], axis=0).reshape(1, 2 * C2)   # f32

    in_b = np.dtype(x.dtype).itemsize
    out_b = np.dtype(out_dtype).itemsize
    weight_bytes = 2 * (C * 2 * C2 * in_b + 2 * C2 * 4)

    vmem_cap = _vmem_capacity_bytes()
    if tile_h is None:
        budget = max(vmem_cap // 2 - weight_bytes, 2 << 20)
        TH = _auto_tile_h(B, H, W, C, C2, in_b, out_b, budget,
                          min_steps=1 if B >= 2 else 2)
    else:
        TH = tile_h
    assert H % TH == 0

    if vmem_limit_bytes is None:
        need = _tile_bytes(TH, W, C, C2, in_b, out_b) + weight_bytes
        cap = max(vmem_cap - (8 << 20), 32 << 20)      # stay below physical VMEM
        vmem_limit_bytes = int(min(max(need * 5 // 4, 32 << 20), cap))

    out = pl.pallas_call(
        conv_expand_kernel,
        out_shape=jax.ShapeDtypeStruct((B, H, 2, W, 2 * C2), out_dtype),
        grid_spec=pltpu.PrefetchScalarGridSpec(
            num_scalar_prefetch=0,
            grid=(B, H // TH),
            in_specs=[
                pl.BlockSpec((1, TH * W, C), lambda b, i: (b, i, 0)),
                pl.BlockSpec((C, 2 * C2), lambda b, i: (0, 0)),
                pl.BlockSpec((1, 2 * C2), lambda b, i: (0, 0)),
            ],
            out_specs=pl.BlockSpec((1, TH, 2, W, 2 * C2),
                                   lambda b, i: (b, i, 0, 0, 0)),
        ),
        compiler_params=pltpu.CompilerParams(
            dimension_semantics=("parallel", "parallel"),
            vmem_limit_bytes=vmem_limit_bytes),
    )(x, w2, b2)

    # (B, H, 2, W, 2*C2) has exactly the memory layout of (B, 2H, 2W, C2).
    return out.reshape(B, 4 * H * W, C2)


def conv_expand_reference(x, H, W, gamma, beta, conv_w, conv_b, eps=1e-5):
    """Pure-JAX reference matching the PyTorch forward (training-mode BN)."""
    B, L, C = x.shape
    xf = x.astype(jnp.float32).reshape(B, H, W, C)
    mean = xf.mean(axis=(0, 1, 2))
    var = xf.var(axis=(0, 1, 2))
    y = (xf - mean) / jnp.sqrt(var + eps) * gamma + beta
    y = jnp.repeat(jnp.repeat(y, 2, axis=1), 2, axis=2)            # nearest upsample x2
    r = jnp.einsum("bhwc,cd->bhwd", y, conv_w.astype(jnp.float32),
                   precision=jax.lax.Precision.HIGHEST) + conv_b.reshape(1, 1, 1, -1)
    return r.reshape(B, 4 * H * W, -1)


if __name__ == "__main__":
    # Small but lane-dense shapes: dim=128 -> output last dim 2*C2 = 128.
    B, H, W, dim = 2, 8, 8, 128
    C2 = dim // 2

    key = jax.random.PRNGKey(0)
    kx, kg, kb, kw, kc = jax.random.split(key, 5)

    x = jax.random.normal(kx, (B, H * W, dim), dtype=jnp.float32)
    gamma = 1.0 + 0.1 * jax.random.normal(kg, (dim,), dtype=jnp.float32)
    beta = 0.1 * jax.random.normal(kb, (dim,), dtype=jnp.float32)
    # Conv2d(dim, dim//2, kernel_size=1): PyTorch weight (C2, C, 1, 1) stored here
    # as (C, C2) (W.T) for the per-pixel matmul, plus bias (C2,).
    conv_w = jax.random.normal(kw, (dim, C2), dtype=jnp.float32) / np.sqrt(dim)
    conv_b = 0.1 * jax.random.normal(kc, (C2,), dtype=jnp.float32)

    # jit so the one-pass BN stats fuse with the f32 cast (single HBM read of x).
    fwd = jax.jit(conv_expand, static_argnums=(1, 2))

    ref = conv_expand_reference(x, H, W, gamma, beta, conv_w, conv_b)

    # f32 path, auto tile size.
    out = jax.block_until_ready(fwd(x, H, W, gamma, beta, conv_w, conv_b))
    assert out.shape == (B, 4 * H * W, C2)
    np.testing.assert_allclose(np.asarray(out), np.asarray(ref), rtol=2e-3, atol=2e-3)

    # f32 path, explicit tiling (exercises a multi-step grid along H).
    out_t = jax.block_until_ready(
        conv_expand(x, H, W, gamma, beta, conv_w, conv_b, tile_h=4))
    np.testing.assert_allclose(np.asarray(out_t), np.asarray(ref), rtol=2e-3, atol=2e-3)

    # bf16 end-to-end hot path (recommended production dtype; f32 MXU accumulation).
    x_bf16 = x.astype(jnp.bfloat16)
    ref_bf16 = conv_expand_reference(x_bf16, H, W, gamma, beta, conv_w, conv_b)
    out_bf = jax.block_until_ready(fwd(x_bf16, H, W, gamma, beta, conv_w, conv_b))
    assert out_bf.dtype == jnp.bfloat16
    np.testing.assert_allclose(np.asarray(out_bf.astype(jnp.float32)),
                               np.asarray(ref_bf16), rtol=5e-2, atol=5e-2)

    # Small-channel fallback (2*C2 = 32 < 128 -> masked lane stores, still correct).
    dim_s = 32
    xs = jax.random.normal(kx, (B, H * W, dim_s), dtype=jnp.float32)
    gs = 1.0 + 0.1 * jax.random.normal(kg, (dim_s,), dtype=jnp.float32)
    bs = 0.1 * jax.random.normal(kb, (dim_s,), dtype=jnp.float32)
    ws = jax.random.normal(kw, (dim_s, dim_s // 2), dtype=jnp.float32) / np.sqrt(dim_s)
    cs = 0.1 * jax.random.normal(kc, (dim_s // 2,), dtype=jnp.float32)
    ref_s = conv_expand_reference(xs, H, W, gs, bs, ws, cs)
    out_s = jax.block_until_ready(conv_expand(xs, H, W, gs, bs, ws, cs))
    np.testing.assert_allclose(np.asarray(out_s), np.asarray(ref_s), rtol=2e-3, atol=2e-3)

    print("KERNEL_OK")
</pallas_src>

<mosaic_0001>
module attributes {stable_mosaic.version = 11 : i64} {
  func.func @conv_expand_kernel(%arg0: i32, %arg1: i32, %arg2: memref<1x64x128xf32, #tpu.memory_space<vmem>>, %arg3: memref<128x128xf32, #tpu.memory_space<vmem>>, %arg4: memref<1x128xf32, #tpu.memory_space<vmem>>, %arg5: memref<1x8x2x8x128xf32, #tpu.memory_space<vmem>>) attributes {dimension_semantics = [#tpu.dimension_semantics<parallel>, #tpu.dimension_semantics<parallel>], iteration_bounds = array<i64: 2, 1>, scalar_prefetch = 0 : i64, scratch_operands = 0 : i64, tpu.core_type = #tpu.core_type<tc>, window_params = [{transform_indices = @transform_0, window_bounds = array<i64: 1, 64, 128>}, {pipeline_mode = #tpu.pipeline_mode<synchronous>, transform_indices = @transform_1, window_bounds = array<i64: 128, 128>}, {pipeline_mode = #tpu.pipeline_mode<synchronous>, transform_indices = @transform_2, window_bounds = array<i64: 1, 128>}, {transform_indices = @transform_3, window_bounds = array<i64: 1, 8, 2, 8, 128>}]} {
    %c0 = arith.constant 0 : index
    %c0_0 = arith.constant 0 : index
    %c0_1 = arith.constant 0 : index
    %0 = vector.load %arg2[%c0, %c0_0, %c0_1] : memref<1x64x128xf32, #tpu.memory_space<vmem>>, vector<1x64x128xf32>
    %1 = vector.shape_cast %0 : vector<1x64x128xf32> to vector<64x128xf32>
    %c0_2 = arith.constant 0 : index
    %c0_3 = arith.constant 0 : index
    %2 = vector.load %arg3[%c0_2, %c0_3] : memref<128x128xf32, #tpu.memory_space<vmem>>, vector<128x128xf32>
    %cst = arith.constant dense<0.000000e+00> : vector<64x128xf32>
    %3 = tpu.matmul %1, %2, %cst {dimension_numbers = #tpu.dot_dimension_numbers<[1], [0], [0], [1], [0, 0, 1, 1], [], []>} : vector<64x128xf32>, vector<128x128xf32>, vector<64x128xf32> -> vector<64x128xf32>
    %c0_4 = arith.constant 0 : index
    %c0_5 = arith.constant 0 : index
    %4 = vector.load %arg4[%c0_4, %c0_5] : memref<1x128xf32, #tpu.memory_space<vmem>>, vector<1x128xf32>
    %5 = vector.broadcast %4 : vector<1x128xf32> to vector<64x128xf32>
    %6 = arith.addf %3, %5 : vector<64x128xf32>
    %7 = vector.shape_cast %6 : vector<64x128xf32> to vector<8x8x128xf32>
    %8 = vector.shape_cast %7 : vector<8x8x128xf32> to vector<1x8x8x128xf32>
    %c0_6 = arith.constant 0 : index
    %c0_7 = arith.constant 0 : index
    %c0_8 = arith.constant 0 : index
    %c0_9 = arith.constant 0 : index
    %c0_10 = arith.constant 0 : index
    %9 = vector.load %arg5[%c0_6, %c0_7, %c0_8, %c0_9, %c0_10] : memref<1x8x2x8x128xf32, #tpu.memory_space<vmem>>, vector<1x8x1x8x128xf32>
    %10 = vector.shape_cast %9 : vector<1x8x1x8x128xf32> to vector<1x8x8x128xf32>
    %11 = vector.shape_cast %8 : vector<1x8x8x128xf32> to vector<1x8x1x8x128xf32>
    tpu.vector_store %arg5[%c0_6, %c0_7, %c0_8, %c0_9, %c0_10], %11 {strides = array<i32>} : memref<1x8x2x8x128xf32, #tpu.memory_space<vmem>>, vector<1x8x1x8x128xf32>,
    %12 = vector.shape_cast %7 : vector<8x8x128xf32> to vector<1x8x8x128xf32>
    %c0_11 = arith.constant 0 : index
    %c0_12 = arith.constant 0 : index
    %c1 = arith.constant 1 : index
    %c0_13 = arith.constant 0 : index
    %c0_14 = arith.constant 0 : index
    %13 = vector.load %arg5[%c0_11, %c0_12, %c1, %c0_13, %c0_14] : memref<1x8x2x8x128xf32, #tpu.memory_space<vmem>>, vector<1x8x1x8x128xf32>
    %14 = vector.shape_cast %13 : vector<1x8x1x8x128xf32> to vector<1x8x8x128xf32>
    %15 = vector.shape_cast %12 : vector<1x8x8x128xf32> to vector<1x8x1x8x128xf32>
    tpu.vector_store %arg5[%c0_11, %c0_12, %c1, %c0_13, %c0_14], %15 {strides = array<i32>} : memref<1x8x2x8x128xf32, #tpu.memory_space<vmem>>, vector<1x8x1x8x128xf32>,
    return
  }
  func.func @transform_0(%arg0: i32, %arg1: i32) -> (i32, i32, i32) {
    %c0_i32 = arith.constant 0 : i32
    %c0_i32_0 = arith.constant 0 : i32
    return %arg0, %arg1, %c0_i32 : i32, i32, i32
  }
  func.func @transform_1(%arg0: i32, %arg1: i32) -> (i32, i32) {
    %c0_i32 = arith.constant 0 : i32
    %c0_i32_0 = arith.constant 0 : i32
    %c0_i32_1 = arith.constant 0 : i32
    return %c0_i32, %c0_i32_0 : i32, i32
  }
  func.func @transform_2(%arg0: i32, %arg1: i32) -> (i32, i32) {
    %c0_i32 = arith.constant 0 : i32
    %c0_i32_0 = arith.constant 0 : i32
    %c0_i32_1 = arith.constant 0 : i32
    return %c0_i32, %c0_i32_0 : i32, i32
  }
  func.func @transform_3(%arg0: i32, %arg1: i32) -> (i32, i32, i32, i32, i32) {
    %c0_i32 = arith.constant 0 : i32
    %c0_i32_0 = arith.constant 0 : i32
    %c0_i32_1 = arith.constant 0 : i32
    %c0_i32_2 = arith.constant 0 : i32
    return %arg0, %arg1, %c0_i32, %c0_i32_0, %c0_i32_1 : i32, i32, i32, i32, i32
  }
}

</mosaic_0001>

<llo_original>
// kernel: conv_expand.1
$region0: #{conv_expand.1}
  #allocation0 [shape = 'u32[]', space=smem, size = 0x4, offset = 0x4, fixed_abs, tag = 'smem constant byte address 0x4 - core index']
  #allocation1 [shape = 'u32[144,128]{1,0:T(1,128)}', space=vmem, size = 0x12000, scoped, tag = 'internal scratch']
  %s0 = inlined_call_operand.vmem [shape: f32[2,64,128], index: 0, kind: input, shape index: {}]
  %s1 = inlined_call_operand.vmem [shape: f32[128,128], index: 1, kind: input, shape index: {}]
  %s2 = inlined_call_operand.vmem [shape: f32[1,128], index: 2, kind: input, shape index: {}]
  %s3 = inlined_call_operand.vmem [shape: f32[2,8,2,8,128], index: 3, kind: output, shape index: {}]
  %s4 = sld [smem:[#allocation0]]
  $region45: #{conv_expand.1} parent=0
    _
  %s6 = ssub.s32 1, %s4
  %s7 = scalar_select 0, %s6, %s4
  loop: start=0, step=1, limit=4
  $region2: #{conv_expand.1} parent=0 // loop_pre_header
    _
  $region3: #{conv_expand.1} parent=0 // loop_header
    %s9 = sphi 0, %s13
    %p10 = scmp.ge.s32.totalorder %s9, 4
    %s16 = sphi 0, %s28
    %s17 = sphi 0, %s24
    %s18 = sphi 0, %s16
    %s19 = sphi 0, %s17
    %s20 = sphi 0, %s18
    %s21 = sphi 0, %s19
    %s33 = sphi 0, %s35
    %s36 = sphi 0, %s33
    %s37 = sphi 0, %s36
    %s53 = sphi 0, %s37
    %s57 = sphi 0, %s57
    %s59 = sphi 0, %s57
    %s60 = sphi 0, %s59
    %s74 = sphi 0, %s60
    %s78 = sphi 0, %s78
    %s80 = sphi 0, %s78
    %s81 = sphi 0, %s80
    %s95 = sphi 0, %s81
    %s103 = sphi 0, %s105
    %s106 = sphi 0, %s103
    %s107 = sphi 0, %s106
    %s123 = sphi 0, %s107
  $region4: #{conv_expand.1} parent=0 // loop_header_branch
    %12 = sbr.rel (%p10) target = $region8
  $region5: #{conv_expand.1} parent=0 // loop_body
    %s14 = ssub.s32 %s9, 1
    %s15 = ssub.s32 %s9, 2
    %s22 = sadd.s32 1, %s17
    %p23 = scmp.ge.s32.totalorder %s22, 1
    %s24 = scalar_select %p23, 0, %s22
    %s25 = sadd.s32 1, %s16
    %s26 = scalar_select %p23, %s25, %s16
    %p27 = scmp.ge.s32.totalorder %s26, 2
    %s28 = scalar_select %p27, 0, %s26
    %s29 = ssub.s32 %s16, %s28
    %s30 = ssub.s32 %s17, %s24
    %s31 = sor.u32 %s29, %s30
    %p32 = scmp.eq.s32.totalorder %s31, 0
    %s34 = sadd.s32 %s33, 1
    %s35 = scalar_select %p32, %s33, %s34
    %p38 = pneg %p32
    %p39 = scmp.eq.s32.totalorder %s9, 1
    %p40 = por %p38, %p39
    %p41 = scmp.ne.s32.totalorder %s33, %s36
    %p42 = scmp.eq.s32.totalorder %s9, 0
    %p43 = por %p41, %p42
    %p44 = scmp.ne.s32.totalorder %s33, %s36
    %p45 = scmp.eq.s32.totalorder %s14, 1
    %p46 = por %p44, %p45
    %p47 = scmp.ne.s32.totalorder %s36, %s37
    %p48 = scmp.eq.s32.totalorder %s14, 0
    %p49 = por %p47, %p48
    %p50 = scmp.ne.s32.totalorder %s36, %s37
    %p51 = scmp.eq.s32.totalorder %s15, 1
    %p52 = por %p50, %p51
    %p54 = scmp.ne.s32.totalorder %s37, %s53
    %p55 = scmp.eq.s32.totalorder %s15, 0
    %p56 = por %p54, %p55
    %s58 = sadd.s32 %s57, 1
    %p61 = scmp.eq.s32.totalorder %s9, 1
    %p62 = scmp.ne.s32.totalorder %s57, %s59
    %p63 = scmp.eq.s32.totalorder %s9, 0
    %p64 = por %p62, %p63
    %p65 = scmp.ne.s32.totalorder %s57, %s59
    %p66 = scmp.eq.s32.totalorder %s14, 1
    %p67 = por %p65, %p66
    %p68 = scmp.ne.s32.totalorder %s59, %s60
    %p69 = scmp.eq.s32.totalorder %s14, 0
    %p70 = por %p68, %p69
    %p71 = scmp.ne.s32.totalorder %s59, %s60
    %p72 = scmp.eq.s32.totalorder %s15, 1
    %p73 = por %p71, %p72
    %p75 = scmp.ne.s32.totalorder %s60, %s74
    %p76 = scmp.eq.s32.totalorder %s15, 0
    %p77 = por %p75, %p76
    %s79 = sadd.s32 %s78, 1
    %p82 = scmp.eq.s32.totalorder %s9, 1
    %p83 = scmp.ne.s32.totalorder %s78, %s80
    %p84 = scmp.eq.s32.totalorder %s9, 0
    %p85 = por %p83, %p84
    %p86 = scmp.ne.s32.totalorder %s78, %s80
    %p87 = scmp.eq.s32.totalorder %s14, 1
    %p88 = por %p86, %p87
    %p89 = scmp.ne.s32.totalorder %s80, %s81
    %p90 = scmp.eq.s32.totalorder %s14, 0
    %p91 = por %p89, %p90
    %p92 = scmp.ne.s32.totalorder %s80, %s81
    %p93 = scmp.eq.s32.totalorder %s15, 1
    %p94 = por %p92, %p93
    %p96 = scmp.ne.s32.totalorder %s81, %s95
    %p97 = scmp.eq.s32.totalorder %s15, 0
    %p98 = por %p96, %p97
    %s99 = ssub.s32 %s16, %s28
    %s100 = ssub.s32 %s17, %s24
    %s101 = sor.u32 %s99, %s100
    %p102 = scmp.eq.s32.totalorder %s101, 0
    %s104 = sadd.s32 %s103, 1
    %s105 = scalar_select %p102, %s103, %s104
    %p108 = pneg %p102
    %p109 = scmp.eq.s32.totalorder %s9, 1
    %p110 = por %p108, %p109
    %p111 = scmp.ne.s32.totalorder %s103, %s106
    %p112 = scmp.eq.s32.totalorder %s9, 0
    %p113 = por %p111, %p112
    %p114 = scmp.ne.s32.totalorder %s103, %s106
    %p115 = scmp.eq.s32.totalorder %s14, 1
    %p116 = por %p114, %p115
    %p117 = scmp.ne.s32.totalorder %s106, %s107
    %p118 = scmp.eq.s32.totalorder %s14, 0
    %p119 = por %p117, %p118
    %p120 = scmp.ne.s32.totalorder %s106, %s107
    %p121 = scmp.eq.s32.totalorder %s15, 1
    %p122 = por %p120, %p121
    %p124 = scmp.ne.s32.totalorder %s107, %s123
    %p125 = scmp.eq.s32.totalorder %s15, 0
    %p126 = por %p124, %p125
    %p127 = scmp.le.s32.totalorder 1, %s9
    %p128 = scmp.lt.s32.totalorder %s9, 3
    %p129 = pnand %p127, %p128
    %p130 = pneg %p129
    // Predicated region
    $region9: #{conv_expand.1} parent=5 // pred_check
      _
    $region10: #{conv_expand.1} parent=5 // pred_check_branch
      %132 = sbr.rel (%p129) target = $region12
    $region11: #{conv_expand.1} parent=5 // pred_region
      %s133 = ssub.s32 %s9, 1
      // Predicated region
      $region13: #{conv_expand.1} parent=11 // pred_check
        %p134 = pneg %p70
      $region14: #{conv_expand.1} parent=11 // pred_check_branch
        %136 = sbr.rel (%p134) target = $region16
      $region15: #{conv_expand.1} parent=11 // pred_region
        _
      $region16: #{conv_expand.1} parent=11 // pred_fallthru
        _
      // Predicated region
      $region17: #{conv_expand.1} parent=11 // pred_check
        %p137 = pneg %p91
      $region18: #{conv_expand.1} parent=11 // pred_check_branch
        %139 = sbr.rel (%p137) target = $region20
      $region19: #{conv_expand.1} parent=11 // pred_region
        _
      $region20: #{conv_expand.1} parent=11 // pred_fallthru
        _
    $region12: #{conv_expand.1} parent=5 // pred_fallthru
      _
    %p140 = scmp.lt.s32.totalorder %s9, 2
    // Predicated region
    $region21: #{conv_expand.1} parent=5 // pred_check
      %p141 = pneg %p140
    $region22: #{conv_expand.1} parent=5 // pred_check_branch
      %143 = sbr.rel (%p141) target = $region24
    $region23: #{conv_expand.1} parent=5 // pred_region
      // Predicated region
      $region25: #{conv_expand.1} parent=23 // pred_check
        %p144 = pneg %p43
      $region26: #{conv_expand.1} parent=23 // pred_check_branch
        %146 = sbr.rel (%p144) target = $region28
      $region27: #{conv_expand.1} parent=23 // pred_region
        %s147 = smul.u32 8, %s17
        %p148 = scmp.lt.s32.totalorder %s16, 1
        %s149 = scalar_select %p148, %s16, 1
        %p150 = scmp.lt.s32.totalorder %s147, 7
        %s151 = scalar_select %p150, %s147, 7
        %s152 = smul.addr %s149, 8
        %s153 = sadd.s32 %s151, %s152
        %s154 = smul.addr %s153, 8
        %s155 = scalar_lea.vmem %s0, %s154
        %s156 = smul.u32 8, %s17
      $region28: #{conv_expand.1} parent=23 // pred_fallthru
        _
    $region24: #{conv_expand.1} parent=5 // pred_fallthru
      _
    %p157 = scmp.le.s32.totalorder 1, %s9
    %p158 = scmp.lt.s32.totalorder %s9, 3
    %p159 = pnand %p157, %p158
    %p160 = pneg %p159
    // Predicated region
    $region29: #{conv_expand.1} parent=5 // pred_check
      _
    $region30: #{conv_expand.1} parent=5 // pred_check_branch
      %162 = sbr.rel (%p159) target = $region32
    $region31: #{conv_expand.1} parent=5 // pred_region
      %s163 = ssub.s32 %s9, 1
      %s164 = smul.u32 8, %s19
      %p165 = scmp.lt.s32.totalorder %s18, 1
      %s166 = scalar_select %p165, %s18, 1
      %p167 = scmp.lt.s32.totalorder %s164, 7
      %s168 = scalar_select %p167, %s164, 7
      %s169 = smul.addr %s166, 8
      %s170 = sadd.s32 %s168, %s169
      %s171 = smul.addr %s170, 8
      %s172 = scalar_lea.vmem %s0, %s171
      %p173 = pneg %p49
      %p174 = pneg %p46
      %p175 = pneg %p70
      %p176 = pneg %p67
      %p177 = pneg %p91
      %p178 = pneg %p88
      %p179 = pneg %p119
      %p180 = pneg %p116
      %s181 = smul.u32 8, %s19
      %p182 = scmp.lt.s32.totalorder %s18, 1
      %s183 = scalar_select %p182, %s18, 1
      %p184 = scmp.lt.s32.totalorder %s181, 7
      %s185 = scalar_select %p184, %s181, 7
      %s186 = smul.addr %s185, 2
      %s187 = smul.addr %s183, 16
      %s188 = sadd.s32 %s186, %s187
      %s189 = smul.addr %s188, 8
      %s190 = scalar_lea.vmem %s3, %s189
      %s191 = smul.u32 8, %s19
      %p192 = scmp.lt.s32.totalorder %s18, 1
      %s193 = scalar_select %p192, %s18, 1
      %p194 = scmp.lt.s32.totalorder %s191, 7
      %s195 = scalar_select %p194, %s191, 7
      %s196 = smul.addr %s193, 8
      %s197 = sadd.s32 %s195, %s196
      %s198 = smul.addr %s197, 8
      %s199 = scalar_lea.vmem %s0, %s198
      %s200 = smul.u32 8, %s19
      %s201 = smul.u32 8, %s19
      %p202 = scmp.lt.s32.totalorder %s18, 1
      %s203 = scalar_select %p202, %s18, 1
      %p204 = scmp.lt.s32.totalorder %s201, 7
      %s205 = scalar_select %p204, %s201, 7
      %s206 = smul.addr %s205, 2
      %s207 = smul.addr %s203, 16
      %s208 = sadd.s32 %s206, %s207
      %s209 = smul.addr %s208, 8
      %s210 = scalar_lea.vmem %s3, %s209
      %s211 = smul.u32 8, %s19
      %v212 = vld [vmem:[%s199] sm:$0xff]
      %v213 = vld [vmem:[%s199 + $0x8] sm:$0xff]
      %v214 = vld [vmem:[%s199 + $0x10] sm:$0xff]
      %v215 = vld [vmem:[%s199 + $0x18] sm:$0xff]
      %v216 = vld [vmem:[%s199 + $0x20] sm:$0xff]
      %v217 = vld [vmem:[%s199 + $0x28] sm:$0xff]
      %v218 = vld [vmem:[%s199 + $0x30] sm:$0xff]
      %v219 = vld [vmem:[%s199 + $0x38] sm:$0xff]
      %v220 = vld [vmem:[%s1] sm:$0xff]
      %v221 = vld [vmem:[%s1 + $0x8] sm:$0xff]
      %v222 = vld [vmem:[%s1 + $0x10] sm:$0xff]
      %v223 = vld [vmem:[%s1 + $0x18] sm:$0xff]
      %v224 = vld [vmem:[%s1 + $0x20] sm:$0xff]
      %v225 = vld [vmem:[%s1 + $0x28] sm:$0xff]
      %v226 = vld [vmem:[%s1 + $0x30] sm:$0xff]
      %v227 = vld [vmem:[%s1 + $0x38] sm:$0xff]
      %v228 = vld [vmem:[%s1 + $0x40] sm:$0xff]
      %v229 = vld [vmem:[%s1 + $0x48] sm:$0xff]
      %v230 = vld [vmem:[%s1 + $0x50] sm:$0xff]
      %v231 = vld [vmem:[%s1 + $0x58] sm:$0xff]
      %v232 = vld [vmem:[%s1 + $0x60] sm:$0xff]
      %v233 = vld [vmem:[%s1 + $0x68] sm:$0xff]
      %v234 = vld [vmem:[%s1 + $0x70] sm:$0xff]
      %v235 = vld [vmem:[%s1 + $0x78] sm:$0xff]
      %v236 = vld [vmem:[%s2] sm:$0x1]
      %v238 = vlaneseq
      %v239 = vshrl.u32 %v238, 7
      %v240 = vsub.s32 0, %v239
      %v241 = vrot.slane %v236, %v240
      %243 = vmatprep.subr.mxu0 0.0
      %244 = vmatpush1.msra.mxu0 %v220
      %245 = vmatprep.subr.mxu0 0.0
      %246 = vmatpush1.msra.mxu0 %v221
      %247 = vmatprep.subr.mxu0 0.0
      %248 = vmatpush1.msra.mxu0 %v222
      %249 = vmatprep.subr.mxu0 0.0
      %250 = vmatpush1.msra.mxu0 %v223
      %251 = vmatprep.subr.mxu0 0.0
      %252 = vmatpush1.msra.mxu0 %v224
      %253 = vmatprep.subr.mxu0 0.0
      %254 = vmatpush1.msra.mxu0 %v225
      %255 = vmatprep.subr.mxu0 0.0
      %256 = vmatpush1.msra.mxu0 %v226
      %257 = vmatprep.subr.mxu0 0.0
      %258 = vmatpush1.msra.mxu0 %v227
      %259 = vmatprep.subr.mxu0 0.0
      %260 = vmatpush1.msra.mxu0 %v228
      %261 = vmatprep.subr.mxu0 0.0
      %262 = vmatpush1.msra.mxu0 %v229
      %263 = vmatprep.subr.mxu0 0.0
      %264 = vmatpush1.msra.mxu0 %v230
      %265 = vmatprep.subr.mxu0 0.0
      %266 = vmatpush1.msra.mxu0 %v231
      %267 = vmatprep.subr.mxu0 0.0
      %268 = vmatpush1.msra.mxu0 %v232
      %269 = vmatprep.subr.mxu0 0.0
      %270 = vmatpush1.msra.mxu0 %v233
      %271 = vmatprep.subr.mxu0 0.0
      %272 = vmatpush1.msra.mxu0 %v234
      %273 = vmatprep.subr.mxu0 0.0
      %274 = vmatpush1.msra.mxu0 %v235
      %275 = vmatprep.subr.mxu0 0.0
      %276 = vmatpush1.msra.mxu0 0.0
      %277 = vmatprep.subr.mxu0 0.0
      %278 = vmatpush1.msra.mxu0 0.0
      %279 = vmatprep.subr.mxu0 0.0
      %280 = vmatpush1.msra.mxu0 0.0
      %281 = vmatprep.subr.mxu0 0.0
      %282 = vmatpush1.msra.mxu0 0.0
      %283 = vmatprep.subr.mxu0 0.0
      %284 = vmatpush1.msra.mxu0 0.0
      %285 = vmatprep.subr.mxu0 0.0
      %286 = vmatpush1.msra.mxu0 0.0
      %287 = vmatprep.subr.mxu0 0.0
      %288 = vmatpush1.msra.mxu0 0.0
      %289 = vmatprep.subr.mxu0 0.0
      %290 = vmatpush1.msra.mxu0 0.0
      %291 = vmatprep.subr.mxu0 0.0
      %292 = vmatpush1.msra.mxu0 0.0
      %293 = vmatprep.subr.mxu0 0.0
      %294 = vmatpush1.msra.mxu0 0.0
      %295 = vmatprep.subr.mxu0 0.0
      %296 = vmatpush1.msra.mxu0 0.0
      %297 = vmatprep.subr.mxu0 0.0
      %298 = vmatpush1.msra.mxu0 0.0
      %299 = vmatprep.subr.mxu0 0.0
      %300 = vmatpush1.msra.mxu0 0.0
      %301 = vmatprep.subr.mxu0 0.0
      %302 = vmatpush1.msra.mxu0 0.0
      %303 = vmatprep.subr.mxu0 0.0
      %304 = vmatpush1.msra.mxu0 0.0
      %305 = vmatprep.subr.mxu0 0.0
      %306 = vmatpush1.msra.mxu0 0.0
      %307 = vmatprep.mubr.f32.mxu0 0.0
      %308 = vmatmul.mubr.f32.gmra.mrb[0].mxu0 %v212
      %v309 = vpop.f32.mrb[0].mxu0
      %v310 = vadd.f32 %v241, %v309
      %v311 = vpop.f32.mrb[0].mxu0
      %312 = vmatprep.mubr.f32.mxu0 0.0
      %313 = vmatmul.mubr.f32.gmra.mrb[0].mxu0 %v213
      %v314 = vpop.f32.mrb[0].mxu0
      %v315 = vadd.f32 %v241, %v314
      %v316 = vpop.f32.mrb[0].mxu0
      %317 = vmatprep.mubr.f32.mxu0 0.0
      %318 = vmatmul.mubr.f32.gmra.mrb[0].mxu0 %v214
      %v319 = vpop.f32.mrb[0].mxu0
      %v320 = vadd.f32 %v241, %v319
      %v321 = vpop.f32.mrb[0].mxu0
      %322 = vmatprep.mubr.f32.mxu0 0.0
      %323 = vmatmul.mubr.f32.gmra.mrb[0].mxu0 %v215
      %v324 = vpop.f32.mrb[0].mxu0
      %v325 = vadd.f32 %v241, %v324
      %v326 = vpop.f32.mrb[0].mxu0
      %327 = vmatprep.mubr.f32.mxu0 0.0
      %328 = vmatmul.mubr.f32.gmra.mrb[0].mxu0 %v216
      %v329 = vpop.f32.mrb[0].mxu0
      %v330 = vadd.f32 %v241, %v329
      %v331 = vpop.f32.mrb[0].mxu0
      %332 = vmatprep.mubr.f32.mxu0 0.0
      %333 = vmatmul.mubr.f32.gmra.mrb[0].mxu0 %v217
      %v334 = vpop.f32.mrb[0].mxu0
      %v335 = vadd.f32 %v241, %v334
      %v336 = vpop.f32.mrb[0].mxu0
      %337 = vmatprep.mubr.f32.mxu0 0.0
      %338 = vmatmul.mubr.f32.gmra.mrb[0].mxu0 %v218
      %v339 = vpop.f32.mrb[0].mxu0
      %v340 = vadd.f32 %v241, %v339
      %v341 = vpop.f32.mrb[0].mxu0
      %342 = vmatprep.mubr.f32.mxu0 0.0
      %343 = vmatmul.mubr.f32.gmra.mrb[0].mxu0 %v219
      %v344 = vpop.f32.mrb[0].mxu0
      %v345 = vadd.f32 %v241, %v344
      %v346 = vpop.f32.mrb[0].mxu0
      %347 = vdwg.mxu0
      %348 = vst [vmem:[%s210] sm:$0xff] %v310
      %349 = vst [vmem:[%s210 + $0x10] sm:$0xff] %v315
      %350 = vst [vmem:[%s210 + $0x20] sm:$0xff] %v320
      %351 = vst [vmem:[%s210 + $0x30] sm:$0xff] %v325
      %352 = vst [vmem:[%s210 + $0x40] sm:$0xff] %v330
      %353 = vst [vmem:[%s210 + $0x50] sm:$0xff] %v335
      %354 = vst [vmem:[%s210 + $0x60] sm:$0xff] %v340
      %355 = vst [vmem:[%s210 + $0x70] sm:$0xff] %v345
      %s356 = scalar_lea.vmem %s210, 8
      %357 = vst [vmem:[%s356] sm:$0xff] %v310
      %358 = vst [vmem:[%s356 + $0x10] sm:$0xff] %v315
      %359 = vst [vmem:[%s356 + $0x20] sm:$0xff] %v320
      %360 = vst [vmem:[%s356 + $0x30] sm:$0xff] %v325
      %361 = vst [vmem:[%s356 + $0x40] sm:$0xff] %v330
      %362 = vst [vmem:[%s356 + $0x50] sm:$0xff] %v335
      %363 = vst [vmem:[%s356 + $0x60] sm:$0xff] %v340
      %364 = vst [vmem:[%s356 + $0x70] sm:$0xff] %v345
      %s365 = smul.u32 8, %s19
      %p366 = scmp.lt.s32.totalorder %s18, 1
      %s367 = scalar_select %p366, %s18, 1
      %p368 = scmp.lt.s32.totalorder %s365, 7
      %s369 = scalar_select %p368, %s365, 7
      %s370 = smul.addr %s369, 2
      %s371 = smul.addr %s367, 16
      %s372 = sadd.s32 %s370, %s371
      %s373 = smul.addr %s372, 8
      %s374 = scalar_lea.vmem %s3, %s373
      // Predicated region
      $region33: #{conv_expand.1} parent=31 // pred_check
        %p375 = pneg %p116
      $region34: #{conv_expand.1} parent=31 // pred_check_branch
        %377 = sbr.rel (%p375) target = $region36
      $region35: #{conv_expand.1} parent=31 // pred_region
        %s378 = smul.u32 8, %s19
      $region36: #{conv_expand.1} parent=31 // pred_fallthru
        _
    $region32: #{conv_expand.1} parent=5 // pred_fallthru
      _
    %p379 = scmp.le.s32.totalorder 2, %s9
    // Predicated region
    $region37: #{conv_expand.1} parent=5 // pred_check
      %p380 = pneg %p379
    $region38: #{conv_expand.1} parent=5 // pred_check_branch
      %382 = sbr.rel (%p380) target = $region40
    $region39: #{conv_expand.1} parent=5 // pred_region
      %s383 = ssub.s32 %s9, 2
      // Predicated region
      $region41: #{conv_expand.1} parent=39 // pred_check
        %p384 = pneg %p122
      $region42: #{conv_expand.1} parent=39 // pred_check_branch
        %386 = sbr.rel (%p384) target = $region44
      $region43: #{conv_expand.1} parent=39 // pred_region
        %s387 = smul.u32 8, %s21
        %p388 = scmp.lt.s32.totalorder %s20, 1
        %s389 = scalar_select %p388, %s20, 1
        %p390 = scmp.lt.s32.totalorder %s387, 7
        %s391 = scalar_select %p390, %s387, 7
        %s392 = smul.addr %s391, 2
        %s393 = smul.addr %s389, 16
        %s394 = sadd.s32 %s392, %s393
        %s395 = smul.addr %s394, 8
        %s396 = scalar_lea.vmem %s3, %s395
      $region44: #{conv_expand.1} parent=39 // pred_fallthru
        _
    $region40: #{conv_expand.1} parent=5 // pred_fallthru
      _
  $region6: #{conv_expand.1} parent=0 // loop_footer
    %s13 = sadd.s32 1, %s9
  $region7: #{conv_expand.1} parent=0 // loop_footer_branch
    %8 = sbr.rel target = $region3
  $region8: #{conv_expand.1} parent=0 // loop_exit
    _

</llo_original>
